<compile_context>
chip_gen: v5e
topology: v5e:2x2
jax: 0.10.0
libtpu: 0.0.40
codegen_flags: <defaults>
</compile_context>

<pallas_src>
import jax
import jax.numpy as jnp
from jax.experimental import pallas as pl
from jax.experimental.pallas import tpu as pltpu


def _din_attention_kernel(t_ref, h_ref, m_ref, w_hth_ref, wt_ref, b1_ref,
                          w2_ref, b2_ref, out_ref, tterm_ref):
    l_idx = pl.program_id(1)

    @pl.when(l_idx == 0)
    def _init():
        # Accumulate straight into the VMEM-resident output block (no scratch
        # accumulator / finalize copy).
        out_ref[...] = jnp.zeros_like(out_ref)
        # Hoist the i-only work out of the L loop: t @ (Wa + Wc) + b1 computed
        # once per batch tile and reused for every L step.
        t_bf0 = t_ref[...].astype(jnp.bfloat16)
        tterm_ref[...] = (
            jnp.dot(t_bf0, wt_ref[...], preferred_element_type=jnp.float32)
            + b1_ref[0, :])

    h = h_ref[...]                                        # (BT, LT, D)  f32
    h_bf = h.astype(jnp.bfloat16)
    t_bf = t_ref[...].astype(jnp.bfloat16)                # (BT, D)
    # bf16-native t*h (bf16 VALU on v6e/v7x); f32 MXU accumulation below keeps
    # the accuracy within tolerance.
    th_bf = t_bf[:, None, :] * h_bf                       # (BT, LT, D)  bf16

    # Fused per-position matmul:  [h, t*h] @ [[Wb - Wc], [Wd]]
    # K = 2D = 128 -> lane-dense MXU operand, one matmul instead of two.
    feat = jnp.concatenate([h_bf, th_bf], axis=-1)        # (BT, LT, 2D) bf16
    hth = jax.lax.dot_general(
        feat, w_hth_ref[...], (((2,), (0,)), ((), ())),
        preferred_element_type=jnp.float32)               # (BT, LT, H)  f32

    hid = jnp.maximum(hth + tterm_ref[...][:, None, :], 0.0)          # ReLU

    # Output layer (H -> 1) as elementwise mul + lane reduction with keepdims:
    # the weights stay (BT, LT, 1), i.e. L remains on the sublane axis for
    # both w and h -> no cross-layout relayout in the weighted sum below.
    logits = jnp.sum(hid * w2_ref[0, :], axis=-1, keepdims=True) + b2_ref[0, 0]
    w = logits * m_ref[...][:, :, None]            # multiplicative mask (no softmax)

    out_ref[...] += jnp.sum(w * h, axis=1)         # (BT, D) f32 partial sum over L


def _pick_block(total, preferred, align):
    """Largest block <= preferred that divides `total` and is `align`-aligned;
    falls back to the full dimension."""
    if total <= preferred:
        return total
    b = (preferred // align) * align
    while b >= align:
        if total % b == 0:
            return b
        b -= align
    return total


def _vmem_limit_bytes():
    """Scoped-VMEM request: generous on v5e/v6e (128 MiB/TC), conservative on
    v7x (64 MiB/TC).  Falls back to the tightest known budget if the hardware
    query is unavailable."""
    cap = None
    get_info = getattr(pltpu, "get_tpu_info", None)
    if get_info is not None:
        try:
            cap = getattr(get_info(), "vmem_capacity_bytes", None)
        except Exception:
            cap = None
    if cap is None:
        cap = 64 * 1024 * 1024          # assume the tightest (v7x per-TC)
    return int(min(48 * 1024 * 1024, int(cap * 0.6)))


def din_attention(target, history, mask, w1, b1, w2, b2,
                  *, block_b=None, block_l=None):
    """target (B,D), history (B,L,D), mask (B,L); params w1 (4D,H), b1 (1,H),
    w2 (1,H) [row of the (H,1) output weight], b2 (1,1)."""
    B, L, D = history.shape
    H = w1.shape[1]
    assert target.shape == (B, D) and mask.shape == (B, L)
    assert w1.shape == (4 * D, H) and b1.shape == (1, H)
    assert w2.shape == (1, H) and b2.shape == (1, 1)

    # Fold concat([t, h, t-h, t*h]) @ W1 (one-time, outside the kernel):
    #   feat @ W1 = t @ (Wa + Wc) + [h, t*h] @ [[Wb - Wc], [Wd]]
    # The [h, t*h] slab is a single pre-concatenated (2D, H) weight so the
    # kernel does one K=128 MXU matmul per position.  Cast to bf16 for MXU.
    wa, wb, wc, wd = w1[0:D], w1[D:2 * D], w1[2 * D:3 * D], w1[3 * D:4 * D]
    w_t = (wa + wc).astype(jnp.bfloat16)                                # (D, H)
    w_hth = jnp.concatenate([wb - wc, wd], axis=0).astype(jnp.bfloat16)  # (2D, H)

    # --- tile selection -----------------------------------------------------
    # L tiles lane-aligned (128) unless L is small.
    lt = block_l if block_l is not None else _pick_block(L, 512, 128)

    vmem_limit = _vmem_limit_bytes()
    if block_b is not None:
        bt = block_b
    else:
        # Real VMEM per history row: f32, lane-padded to a multiple of 128.
        d_pad = ((D + 127) // 128) * 128
        hist_row_bytes = lt * d_pad * 4
        # x2 double-buffering + ~x3 for the live f32/bf16 intermediates the
        # kernel body materialises per tile -> ~x5 of one history tile.
        budget_rows = max(8, vmem_limit // (hist_row_bytes * 5))
        # Keep >= 2 batch tiles so the "parallel" axis can shard across the
        # two TensorCores on v7x (irrelevant on v5e/v6e).
        if B >= 16:
            budget_rows = min(budget_rows, max(8, (B // 2) // 8 * 8))
        bt = _pick_block(B, budget_rows, 8)
    assert B % bt == 0 and L % lt == 0, (bt, lt)

    grid = (B // bt, L // lt)

    in_specs = [
        pl.BlockSpec((bt, D), lambda i, l: (i, 0)),         # target: per batch tile
        pl.BlockSpec((bt, lt, D), lambda i, l: (i, l, 0)),  # history: streamed over L
        pl.BlockSpec((bt, lt), lambda i, l: (i, l)),        # mask: streamed over L
        pl.BlockSpec((2 * D, H), lambda i, l: (0, 0)),      # fused [h, t*h] weight
        pl.BlockSpec((D, H), lambda i, l: (0, 0)),          # t weight
        pl.BlockSpec((1, H), lambda i, l: (0, 0)),          # b1
        pl.BlockSpec((1, H), lambda i, l: (0, 0)),          # w2 (stored as a row)
        pl.BlockSpec((1, 1), lambda i, l: (0, 0)),          # b2
    ]
    # NOTE: output last dim D=64 (<128 lanes) lowers to masked stores; output
    # traffic is only 1/L of the history traffic, so a lane-dense repack is not
    # worth the in-kernel relayout here.
    # TODO(synk): lane-pack two sequence positions ((B, L/2, 2D) history) to
    # fill all 128 lanes of the h-derived tensors on v7x; larger refactor.
    out_spec = pl.BlockSpec((bt, D), lambda i, l: (i, 0))

    return pl.pallas_call(
        _din_attention_kernel,
        out_shape=jax.ShapeDtypeStruct((B, D), jnp.float32),
        grid_spec=pltpu.PrefetchScalarGridSpec(
            num_scalar_prefetch=0,
            grid=grid,
            in_specs=in_specs,
            out_specs=out_spec,
            scratch_shapes=[pltpu.VMEM((bt, H), jnp.float32)],  # hoisted t-term
        ),
        compiler_params=pltpu.CompilerParams(
            dimension_semantics=("parallel", "arbitrary"),
            vmem_limit_bytes=vmem_limit,
        ),
    )(target, history, mask, w_hth, w_t, b1, w2, b2)


def din_attention_ref(target, history, mask, w1, b1, w2, b2):
    """Pure-JAX f32 reference matching the PyTorch forward."""
    B, L, D = history.shape
    t = jnp.broadcast_to(target[:, None, :], (B, L, D))
    feat = jnp.concatenate([t, history, t - history, t * history], axis=-1)
    hid = jnp.maximum(feat.reshape(-1, 4 * D) @ w1 + b1[0], 0.0)
    logits = hid @ w2[0][:, None] + b2[0, 0]
    w = logits.reshape(B, L) * mask
    return jnp.sum(w[:, :, None] * history, axis=1)


if __name__ == "__main__":
    B, L, D, H = 16, 8, 64, 32   # batch, seq_len, embedding_dim, attention_units[0]

    key = jax.random.PRNGKey(0)
    k_t, k_h, k_m, k_w1, k_b1, k_w2, k_b2 = jax.random.split(key, 7)

    target = jax.random.normal(k_t, (B, D), dtype=jnp.float32)
    history = jax.random.normal(k_h, (B, L, D), dtype=jnp.float32)
    mask = (jax.random.uniform(k_m, (B, L)) > 0.25).astype(jnp.float32)

    # Deterministic synthetic MLP parameters (input 4D -> H -> 1, bias=True).
    w1 = jax.random.normal(k_w1, (4 * D, H), dtype=jnp.float32) * 0.05
    b1 = jax.random.normal(k_b1, (1, H), dtype=jnp.float32) * 0.01
    w2 = jax.random.normal(k_w2, (1, H), dtype=jnp.float32) * 0.05  # (H,1) stored as a row
    b2 = jax.random.normal(k_b2, (1, 1), dtype=jnp.float32) * 0.01

    out = din_attention(target, history, mask, w1, b1, w2, b2)  # grid = (2, 1)
    out = jax.block_until_ready(out)

    ref = din_attention_ref(target, history, mask, w1, b1, w2, b2)
    assert out.shape == (B, D)
    # bf16 MXU operands (f32 accumulation) vs the pure-f32 reference.
    assert jnp.allclose(out, ref, atol=2e-2, rtol=2e-2), \
        float(jnp.max(jnp.abs(out - ref)))

    print("KERNEL_OK")
</pallas_src>

<mosaic_0001>
module attributes {stable_mosaic.version = 11 : i64} {
  func.func @_din_attention_kernel(%arg0: i32, %arg1: i32, %arg2: memref<8x64xf32, #tpu.memory_space<vmem>>, %arg3: memref<8x8x64xf32, #tpu.memory_space<vmem>>, %arg4: memref<8x8xf32, #tpu.memory_space<vmem>>, %arg5: memref<128x32xbf16, #tpu.memory_space<vmem>>, %arg6: memref<64x32xbf16, #tpu.memory_space<vmem>>, %arg7: memref<1x32xf32, #tpu.memory_space<vmem>>, %arg8: memref<1x32xf32, #tpu.memory_space<vmem>>, %arg9: memref<1x1xf32, #tpu.memory_space<vmem>>, %arg10: memref<8x64xf32, #tpu.memory_space<vmem>>, %arg11: memref<8x32xf32, #tpu.memory_space<vmem>>) attributes {dimension_semantics = [#tpu.dimension_semantics<parallel>, #tpu.dimension_semantics<arbitrary>], iteration_bounds = array<i64: 2, 1>, scalar_prefetch = 0 : i64, scratch_operands = 1 : i64, tpu.core_type = #tpu.core_type<tc>, window_params = [{transform_indices = @transform_0, window_bounds = array<i64: 8, 64>}, {transform_indices = @transform_1, window_bounds = array<i64: 8, 8, 64>}, {transform_indices = @transform_2, window_bounds = array<i64: 8, 8>}, {pipeline_mode = #tpu.pipeline_mode<synchronous>, transform_indices = @transform_3, window_bounds = array<i64: 128, 32>}, {pipeline_mode = #tpu.pipeline_mode<synchronous>, transform_indices = @transform_4, window_bounds = array<i64: 64, 32>}, {pipeline_mode = #tpu.pipeline_mode<synchronous>, transform_indices = @transform_5, window_bounds = array<i64: 1, 32>}, {pipeline_mode = #tpu.pipeline_mode<synchronous>, transform_indices = @transform_6, window_bounds = array<i64: 1, 32>}, {pipeline_mode = #tpu.pipeline_mode<synchronous>, transform_indices = @transform_7, window_bounds = array<i64: 1, 1>}, {transform_indices = @transform_8, window_bounds = array<i64: 8, 64>}]} {
    %c0_i32 = arith.constant 0 : i32
    %0 = arith.cmpi eq, %arg1, %c0_i32 : i32
    %1 = arith.extui %0 : i1 to i32
    %c0_i32_0 = arith.constant 0 : i32
    %2 = arith.cmpi ne, %1, %c0_i32_0 : i32
    scf.if %2 {
      %cst_22 = arith.constant 0.000000e+00 : f32
      %39 = vector.broadcast %cst_22 : f32 to vector<8x64xf32>
      %c0_23 = arith.constant 0 : index
      %c0_24 = arith.constant 0 : index
      %40 = vector.load %arg10[%c0_23, %c0_24] : memref<8x64xf32, #tpu.memory_space<vmem>>, vector<8x64xf32>
      tpu.vector_store %arg10[%c0_23, %c0_24], %39 {strides = array<i32>} : memref<8x64xf32, #tpu.memory_space<vmem>>, vector<8x64xf32>,
      %c0_25 = arith.constant 0 : index
      %c0_26 = arith.constant 0 : index
      %41 = vector.load %arg2[%c0_25, %c0_26] : memref<8x64xf32, #tpu.memory_space<vmem>>, vector<8x64xf32>
      %42 = arith.truncf %41 : vector<8x64xf32> to vector<8x64xbf16>
      %c0_27 = arith.constant 0 : index
      %c0_28 = arith.constant 0 : index
      %43 = vector.load %arg6[%c0_27, %c0_28] : memref<64x32xbf16, #tpu.memory_space<vmem>>, vector<64x32xbf16>
      %cst_29 = arith.constant dense<0.000000e+00> : vector<8x32xf32>
      %44 = tpu.matmul %42, %43, %cst_29 {dimension_numbers = #tpu.dot_dimension_numbers<[1], [0], [0], [1], [0, 0, 1, 1], [], []>} : vector<8x64xbf16>, vector<64x32xbf16>, vector<8x32xf32> -> vector<8x32xf32>
      %c0_30 = arith.constant 0 : index
      %c0_31 = arith.constant 0 : index
      %45 = vector.load %arg7[%c0_30, %c0_31] : memref<1x32xf32, #tpu.memory_space<vmem>>, vector<1x32xf32>
      %46 = vector.shape_cast %45 : vector<1x32xf32> to vector<32xf32>
      %47 = vector.shape_cast %46 : vector<32xf32> to vector<1x32xf32>
      %48 = vector.broadcast %47 : vector<1x32xf32> to vector<8x32xf32>
      %49 = arith.addf %44, %48 : vector<8x32xf32>
      %c0_32 = arith.constant 0 : index
      %c0_33 = arith.constant 0 : index
      %50 = vector.load %arg11[%c0_32, %c0_33] : memref<8x32xf32, #tpu.memory_space<vmem>>, vector<8x32xf32>
      tpu.vector_store %arg11[%c0_32, %c0_33], %49 {strides = array<i32>} : memref<8x32xf32, #tpu.memory_space<vmem>>, vector<8x32xf32>,
    } else {
    }
    %c0 = arith.constant 0 : index
    %c0_1 = arith.constant 0 : index
    %c0_2 = arith.constant 0 : index
    %3 = vector.load %arg3[%c0, %c0_1, %c0_2] : memref<8x8x64xf32, #tpu.memory_space<vmem>>, vector<8x8x64xf32>
    %4 = arith.truncf %3 : vector<8x8x64xf32> to vector<8x8x64xbf16>
    %c0_3 = arith.constant 0 : index
    %c0_4 = arith.constant 0 : index
    %5 = vector.load %arg2[%c0_3, %c0_4] : memref<8x64xf32, #tpu.memory_space<vmem>>, vector<8x64xf32>
    %6 = arith.truncf %5 : vector<8x64xf32> to vector<8x64xbf16>
    %7 = vector.shape_cast %6 : vector<8x64xbf16> to vector<8x1x64xbf16>
    %8 = vector.broadcast %7 : vector<8x1x64xbf16> to vector<8x8x64xbf16>
    %9 = arith.mulf %8, %4 : vector<8x8x64xbf16>
    %10 = tpu.concatenate %4, %9 in 2 : vector<8x8x64xbf16>, vector<8x8x64xbf16> -> vector<8x8x128xbf16>
    %c0_5 = arith.constant 0 : index
    %c0_6 = arith.constant 0 : index
    %11 = vector.load %arg5[%c0_5, %c0_6] : memref<128x32xbf16, #tpu.memory_space<vmem>>, vector<128x32xbf16>
    %cst = arith.constant dense<0.000000e+00> : vector<8x8x32xf32>
    %12 = tpu.matmul %10, %11, %cst {dimension_numbers = #tpu.dot_dimension_numbers<[2], [0], [0, 1], [1], [0, 0, 0, 1, 1, 1], [], []>} : vector<8x8x128xbf16>, vector<128x32xbf16>, vector<8x8x32xf32> -> vector<8x8x32xf32>
    %c0_7 = arith.constant 0 : index
    %c0_8 = arith.constant 0 : index
    %13 = vector.load %arg11[%c0_7, %c0_8] : memref<8x32xf32, #tpu.memory_space<vmem>>, vector<8x32xf32>
    %14 = vector.shape_cast %13 : vector<8x32xf32> to vector<8x1x32xf32>
    %15 = vector.broadcast %14 : vector<8x1x32xf32> to vector<8x8x32xf32>
    %16 = arith.addf %12, %15 : vector<8x8x32xf32>
    %cst_9 = arith.constant 0.000000e+00 : f32
    %17 = vector.broadcast %cst_9 : f32 to vector<8x8x32xf32>
    %18 = arith.maximumf %16, %17 : vector<8x8x32xf32>
    %c0_10 = arith.constant 0 : index
    %c0_11 = arith.constant 0 : index
    %19 = vector.load %arg8[%c0_10, %c0_11] : memref<1x32xf32, #tpu.memory_space<vmem>>, vector<1x32xf32>
    %20 = vector.shape_cast %19 : vector<1x32xf32> to vector<32xf32>
    %21 = vector.shape_cast %20 : vector<32xf32> to vector<1x1x32xf32>
    %22 = vector.broadcast %21 : vector<1x1x32xf32> to vector<8x8x32xf32>
    %23 = arith.mulf %18, %22 : vector<8x8x32xf32>
    %cst_12 = arith.constant dense<0.000000e+00> : vector<8x8xf32>
    %24 = vector.multi_reduction <add>, %23, %cst_12 [2] : vector<8x8x32xf32> to vector<8x8xf32>
    %25 = vector.shape_cast %24 : vector<8x8xf32> to vector<8x8x1xf32>
    %c0_13 = arith.constant 0 : index
    %c0_14 = arith.constant 0 : index
    %26 = vector.load %arg9[%c0_13, %c0_14] : memref<1x1xf32, #tpu.memory_space<vmem>>, vector<1x1xf32>
    %27 = vector.extract %26[0, 0] : f32 from vector<1x1xf32>
    %28 = vector.broadcast %27 : f32 to vector<8x8x1xf32>
    %29 = arith.addf %25, %28 : vector<8x8x1xf32>
    %c0_15 = arith.constant 0 : index
    %c0_16 = arith.constant 0 : index
    %30 = vector.load %arg4[%c0_15, %c0_16] : memref<8x8xf32, #tpu.memory_space<vmem>>, vector<8x8xf32>
    %31 = vector.shape_cast %30 : vector<8x8xf32> to vector<8x8x1xf32>
    %32 = arith.mulf %29, %31 : vector<8x8x1xf32>
    %c0_17 = arith.constant 0 : index
    %c0_18 = arith.constant 0 : index
    %33 = vector.load %arg10[%c0_17, %c0_18] : memref<8x64xf32, #tpu.memory_space<vmem>>, vector<8x64xf32>
    %34 = vector.broadcast %32 : vector<8x8x1xf32> to vector<8x8x64xf32>
    %35 = arith.mulf %34, %3 : vector<8x8x64xf32>
    %cst_19 = arith.constant dense<0.000000e+00> : vector<8x64xf32>
    %36 = vector.multi_reduction <add>, %35, %cst_19 [1] : vector<8x8x64xf32> to vector<8x64xf32>
    %37 = arith.addf %33, %36 : vector<8x64xf32>
    %c0_20 = arith.constant 0 : index
    %c0_21 = arith.constant 0 : index
    %38 = vector.load %arg10[%c0_20, %c0_21] : memref<8x64xf32, #tpu.memory_space<vmem>>, vector<8x64xf32>
    tpu.vector_store %arg10[%c0_20, %c0_21], %37 {strides = array<i32>} : memref<8x64xf32, #tpu.memory_space<vmem>>, vector<8x64xf32>,
    return
  }
  func.func @transform_0(%arg0: i32, %arg1: i32) -> (i32, i32) {
    %c0_i32 = arith.constant 0 : i32
    %c0_i32_0 = arith.constant 0 : i32
    return %arg0, %c0_i32 : i32, i32
  }
  func.func @transform_1(%arg0: i32, %arg1: i32) -> (i32, i32, i32) {
    %c0_i32 = arith.constant 0 : i32
    %c0_i32_0 = arith.constant 0 : i32
    return %arg0, %arg1, %c0_i32 : i32, i32, i32
  }
  func.func @transform_2(%arg0: i32, %arg1: i32) -> (i32, i32) {
    %c0_i32 = arith.constant 0 : i32
    return %arg0, %arg1 : i32, i32
  }
  func.func @transform_3(%arg0: i32, %arg1: i32) -> (i32, i32) {
    %c0_i32 = arith.constant 0 : i32
    %c0_i32_0 = arith.constant 0 : i32
    %c0_i32_1 = arith.constant 0 : i32
    return %c0_i32, %c0_i32_0 : i32, i32
  }
  func.func @transform_4(%arg0: i32, %arg1: i32) -> (i32, i32) {
    %c0_i32 = arith.constant 0 : i32
    %c0_i32_0 = arith.constant 0 : i32
    %c0_i32_1 = arith.constant 0 : i32
    return %c0_i32, %c0_i32_0 : i32, i32
  }
  func.func @transform_5(%arg0: i32, %arg1: i32) -> (i32, i32) {
    %c0_i32 = arith.constant 0 : i32
    %c0_i32_0 = arith.constant 0 : i32
    %c0_i32_1 = arith.constant 0 : i32
    return %c0_i32, %c0_i32_0 : i32, i32
  }
  func.func @transform_6(%arg0: i32, %arg1: i32) -> (i32, i32) {
    %c0_i32 = arith.constant 0 : i32
    %c0_i32_0 = arith.constant 0 : i32
    %c0_i32_1 = arith.constant 0 : i32
    return %c0_i32, %c0_i32_0 : i32, i32
  }
  func.func @transform_7(%arg0: i32, %arg1: i32) -> (i32, i32) {
    %c0_i32 = arith.constant 0 : i32
    %c0_i32_0 = arith.constant 0 : i32
    %c0_i32_1 = arith.constant 0 : i32
    return %c0_i32, %c0_i32_0 : i32, i32
  }
  func.func @transform_8(%arg0: i32, %arg1: i32) -> (i32, i32) {
    %c0_i32 = arith.constant 0 : i32
    %c0_i32_0 = arith.constant 0 : i32
    return %arg0, %c0_i32 : i32, i32
  }
}

</mosaic_0001>

<llo_original>
// kernel: tpu_custom_call.1
$region0: #{tpu_custom_call.1}
  #allocation0 [shape = 'u32[]', space=smem, size = 0x4, offset = 0x4, fixed_abs, tag = 'smem constant byte address 0x4 - core index']
  #allocation1 [shape = 'u32[72,128]{1,0:T(1,128)}', space=vmem, size = 0x9000, scoped, tag = 'internal scratch']
  #allocation2 [shape = 'f32[8,32]{1,0:T(8,128)}', space=vmem, size = 0x1000, scoped, tag = 'scratch operand']
  #allocation3 [shape = 'f32[1,1]{1,0:T(1,128)S(1)}', space=vmem, size = 0x200, scoped, tag = 'scoped memory for tpu_custom_call.1']
  %s0 = inlined_call_operand.vmem [shape: f32[16,64], index: 0, kind: input, shape index: {}]
  %s1 = inlined_call_operand.hbm [shape: f32[16,8,64], index: 1, kind: input, shape index: {}]
  %s2 = inlined_call_operand.vmem [shape: f32[16,8], index: 2, kind: input, shape index: {}]
  %s3 = inlined_call_operand.vmem [shape: bf16[128,32], index: 3, kind: input, shape index: {}]
  %s4 = inlined_call_operand.vmem [shape: bf16[64,32], index: 4, kind: input, shape index: {}]
  %s5 = inlined_call_operand.vmem [shape: f32[1,32], index: 5, kind: input, shape index: {}]
  %s6 = inlined_call_operand.vmem [shape: f32[1,32], index: 6, kind: input, shape index: {}]
  %s7 = inlined_call_operand.<no memory space> [shape: f32[1,1], index: 7, kind: input, shape index: {}]
  %s8 = inlined_call_operand.hbm [shape: f32[16,64], index: 8, kind: output, shape index: {}]
  %s9 = sld [smem:[#allocation0]]
  $region73: #{tpu_custom_call.1} parent=0
    _
  %s11 = ssub.s32 1, %s9
  %s12 = scalar_select 0, %s11, %s9
  %v13 = vstv %s7
  %14 = vst [vmem:[#allocation3] sm:$0x1] %v13
  $region1: #{tpu_custom_call.1} parent=0
    #allocation4 [shape = 'u8[65536]{0}', space=vmem, size = 0x10000, scoped, tag = 'input window, operand 1']
    #allocation5 [shape = 's32[2]{0}', space=sflag, size = 0x8, scoped, tag = 'scoped memory for tpu_custom_call.1']
    #allocation6 [shape = 's32[2]{0}', space=sflag, size = 0x8, scoped, tag = 'scoped memory for tpu_custom_call.1']
    #allocation7 [shape = 'u8[8192]{0}', space=vmem, size = 0x2000, scoped, tag = 'output window, operand 0']
    %15 = vsyncpa [#allocation5], 0
    %s16 = scalar_lea.sflag [#allocation5], 1
    %17 = vsyncpa %s16, 0
    %18 = vsyncpa [#allocation6], 0
    %s19 = scalar_lea.sflag [#allocation6], 1
    %20 = vsyncpa %s19, 0
    loop: start=0, step=1, limit=4
    $region2: #{tpu_custom_call.1} parent=1 // loop_pre_header
      _
    $region3: #{tpu_custom_call.1} parent=1 // loop_header
      %s22 = sphi 0, %s26
      %p23 = scmp.ge.s32.totalorder %s22, 4
      %s29 = sphi 0, %s41
      %s30 = sphi 0, %s37
      %s31 = sphi 0, %s29
      %s32 = sphi 0, %s30
      %s33 = sphi 0, %s31
      %s34 = sphi 0, %s32
      %s44 = sphi 0, %s46
      %s47 = sphi 0, %s44
      %s48 = sphi 0, %s47
      %s64 = sphi 0, %s48
      %s72 = sphi 0, %s74
      %s75 = sphi 0, %s72
      %s76 = sphi 0, %s75
      %s92 = sphi 0, %s76
      %s100 = sphi 0, %s102
      %s103 = sphi 0, %s100
      %s104 = sphi 0, %s103
      %s120 = sphi 0, %s104
      %s124 = sphi 0, %s124
      %s126 = sphi 0, %s124
      %s127 = sphi 0, %s126
      %s141 = sphi 0, %s127
      %s145 = sphi 0, %s145
      %s147 = sphi 0, %s145
      %s148 = sphi 0, %s147
      %s162 = sphi 0, %s148
      %s166 = sphi 0, %s166
      %s168 = sphi 0, %s166
      %s169 = sphi 0, %s168
      %s183 = sphi 0, %s169
      %s187 = sphi 0, %s187
      %s189 = sphi 0, %s187
      %s190 = sphi 0, %s189
      %s204 = sphi 0, %s190
      %s208 = sphi 0, %s208
      %s210 = sphi 0, %s208
      %s211 = sphi 0, %s210
      %s225 = sphi 0, %s211
      %s231 = sphi 0, %s233
      %s234 = sphi 0, %s231
      %s235 = sphi 0, %s234
      %s251 = sphi 0, %s235
    $region4: #{tpu_custom_call.1} parent=1 // loop_header_branch
      %25 = sbr.rel (%p23) target = $region8
    $region5: #{tpu_custom_call.1} parent=1 // loop_body
      %s27 = ssub.s32 %s22, 1
      %s28 = ssub.s32 %s22, 2
      %s35 = sadd.s32 1, %s30
      %p36 = scmp.ge.s32.totalorder %s35, 1
      %s37 = scalar_select %p36, 0, %s35
      %s38 = sadd.s32 1, %s29
      %s39 = scalar_select %p36, %s38, %s29
      %p40 = scmp.ge.s32.totalorder %s39, 2
      %s41 = scalar_select %p40, 0, %s39
      %s42 = ssub.s32 %s29, %s41
      %p43 = scmp.eq.s32.totalorder %s42, 0
      %s45 = sadd.s32 %s44, 1
      %s46 = scalar_select %p43, %s44, %s45
      %p49 = pneg %p43
      %p50 = scmp.eq.s32.totalorder %s22, 1
      %p51 = por %p49, %p50
      %p52 = scmp.ne.s32.totalorder %s44, %s47
      %p53 = scmp.eq.s32.totalorder %s22, 0
      %p54 = por %p52, %p53
      %p55 = scmp.ne.s32.totalorder %s44, %s47
      %p56 = scmp.eq.s32.totalorder %s27, 1
      %p57 = por %p55, %p56
      %p58 = scmp.ne.s32.totalorder %s47, %s48
      %p59 = scmp.eq.s32.totalorder %s27, 0
      %p60 = por %p58, %p59
      %p61 = scmp.ne.s32.totalorder %s47, %s48
      %p62 = scmp.eq.s32.totalorder %s28, 1
      %p63 = por %p61, %p62
      %p65 = scmp.ne.s32.totalorder %s48, %s64
      %p66 = scmp.eq.s32.totalorder %s28, 0
      %p67 = por %p65, %p66
      %s68 = ssub.s32 %s29, %s41
      %s69 = ssub.s32 %s30, %s37
      %s70 = sor.u32 %s68, %s69
      %p71 = scmp.eq.s32.totalorder %s70, 0
      %s73 = sadd.s32 %s72, 1
      %s74 = scalar_select %p71, %s72, %s73
      %p77 = pneg %p71
      %p78 = scmp.eq.s32.totalorder %s22, 1
      %p79 = por %p77, %p78
      %p80 = scmp.ne.s32.totalorder %s72, %s75
      %p81 = scmp.eq.s32.totalorder %s22, 0
      %p82 = por %p80, %p81
      %p83 = scmp.ne.s32.totalorder %s72, %s75
      %p84 = scmp.eq.s32.totalorder %s27, 1
      %p85 = por %p83, %p84
      %p86 = scmp.ne.s32.totalorder %s75, %s76
      %p87 = scmp.eq.s32.totalorder %s27, 0
      %p88 = por %p86, %p87
      %p89 = scmp.ne.s32.totalorder %s75, %s76
      %p90 = scmp.eq.s32.totalorder %s28, 1
      %p91 = por %p89, %p90
      %p93 = scmp.ne.s32.totalorder %s76, %s92
      %p94 = scmp.eq.s32.totalorder %s28, 0
      %p95 = por %p93, %p94
      %s96 = ssub.s32 %s29, %s41
      %s97 = ssub.s32 %s30, %s37
      %s98 = sor.u32 %s96, %s97
      %p99 = scmp.eq.s32.totalorder %s98, 0
      %s101 = sadd.s32 %s100, 1
      %s102 = scalar_select %p99, %s100, %s101
      %p105 = pneg %p99
      %p106 = scmp.eq.s32.totalorder %s22, 1
      %p107 = por %p105, %p106
      %p108 = scmp.ne.s32.totalorder %s100, %s103
      %p109 = scmp.eq.s32.totalorder %s22, 0
      %p110 = por %p108, %p109
      %p111 = scmp.ne.s32.totalorder %s100, %s103
      %p112 = scmp.eq.s32.totalorder %s27, 1
      %p113 = por %p111, %p112
      %p114 = scmp.ne.s32.totalorder %s103, %s104
      %p115 = scmp.eq.s32.totalorder %s27, 0
      %p116 = por %p114, %p115
      %p117 = scmp.ne.s32.totalorder %s103, %s104
      %p118 = scmp.eq.s32.totalorder %s28, 1
      %p119 = por %p117, %p118
      %p121 = scmp.ne.s32.totalorder %s104, %s120
      %p122 = scmp.eq.s32.totalorder %s28, 0
      %p123 = por %p121, %p122
      %s125 = sadd.s32 %s124, 1
      %p128 = scmp.eq.s32.totalorder %s22, 1
      %p129 = scmp.ne.s32.totalorder %s124, %s126
      %p130 = scmp.eq.s32.totalorder %s22, 0
      %p131 = por %p129, %p130
      %p132 = scmp.ne.s32.totalorder %s124, %s126
      %p133 = scmp.eq.s32.totalorder %s27, 1
      %p134 = por %p132, %p133
      %p135 = scmp.ne.s32.totalorder %s126, %s127
      %p136 = scmp.eq.s32.totalorder %s27, 0
      %p137 = por %p135, %p136
      %p138 = scmp.ne.s32.totalorder %s126, %s127
      %p139 = scmp.eq.s32.totalorder %s28, 1
      %p140 = por %p138, %p139
      %p142 = scmp.ne.s32.totalorder %s127, %s141
      %p143 = scmp.eq.s32.totalorder %s28, 0
      %p144 = por %p142, %p143
      %s146 = sadd.s32 %s145, 1
      %p149 = scmp.eq.s32.totalorder %s22, 1
      %p150 = scmp.ne.s32.totalorder %s145, %s147
      %p151 = scmp.eq.s32.totalorder %s22, 0
      %p152 = por %p150, %p151
      %p153 = scmp.ne.s32.totalorder %s145, %s147
      %p154 = scmp.eq.s32.totalorder %s27, 1
      %p155 = por %p153, %p154
      %p156 = scmp.ne.s32.totalorder %s147, %s148
      %p157 = scmp.eq.s32.totalorder %s27, 0
      %p158 = por %p156, %p157
      %p159 = scmp.ne.s32.totalorder %s147, %s148
      %p160 = scmp.eq.s32.totalorder %s28, 1
      %p161 = por %p159, %p160
      %p163 = scmp.ne.s32.totalorder %s148, %s162
      %p164 = scmp.eq.s32.totalorder %s28, 0
      %p165 = por %p163, %p164
      %s167 = sadd.s32 %s166, 1
      %p170 = scmp.eq.s32.totalorder %s22, 1
      %p171 = scmp.ne.s32.totalorder %s166, %s168
      %p172 = scmp.eq.s32.totalorder %s22, 0
      %p173 = por %p171, %p172
      %p174 = scmp.ne.s32.totalorder %s166, %s168
      %p175 = scmp.eq.s32.totalorder %s27, 1
      %p176 = por %p174, %p175
      %p177 = scmp.ne.s32.totalorder %s168, %s169
      %p178 = scmp.eq.s32.totalorder %s27, 0
      %p179 = por %p177, %p178
      %p180 = scmp.ne.s32.totalorder %s168, %s169
      %p181 = scmp.eq.s32.totalorder %s28, 1
      %p182 = por %p180, %p181
      %p184 = scmp.ne.s32.totalorder %s169, %s183
      %p185 = scmp.eq.s32.totalorder %s28, 0
      %p186 = por %p184, %p185
      %s188 = sadd.s32 %s187, 1
      %p191 = scmp.eq.s32.totalorder %s22, 1
      %p192 = scmp.ne.s32.totalorder %s187, %s189
      %p193 = scmp.eq.s32.totalorder %s22, 0
      %p194 = por %p192, %p193
      %p195 = scmp.ne.s32.totalorder %s187, %s189
      %p196 = scmp.eq.s32.totalorder %s27, 1
      %p197 = por %p195, %p196
      %p198 = scmp.ne.s32.totalorder %s189, %s190
      %p199 = scmp.eq.s32.totalorder %s27, 0
      %p200 = por %p198, %p199
      %p201 = scmp.ne.s32.totalorder %s189, %s190
      %p202 = scmp.eq.s32.totalorder %s28, 1
      %p203 = por %p201, %p202
      %p205 = scmp.ne.s32.totalorder %s190, %s204
      %p206 = scmp.eq.s32.totalorder %s28, 0
      %p207 = por %p205, %p206
      %s209 = sadd.s32 %s208, 1
      %p212 = scmp.eq.s32.totalorder %s22, 1
      %p213 = scmp.ne.s32.totalorder %s208, %s210
      %p214 = scmp.eq.s32.totalorder %s22, 0
      %p215 = por %p213, %p214
      %p216 = scmp.ne.s32.totalorder %s208, %s210
      %p217 = scmp.eq.s32.totalorder %s27, 1
      %p218 = por %p216, %p217
      %p219 = scmp.ne.s32.totalorder %s210, %s211
      %p220 = scmp.eq.s32.totalorder %s27, 0
      %p221 = por %p219, %p220
      %p222 = scmp.ne.s32.totalorder %s210, %s211
      %p223 = scmp.eq.s32.totalorder %s28, 1
      %p224 = por %p222, %p223
      %p226 = scmp.ne.s32.totalorder %s211, %s225
      %p227 = scmp.eq.s32.totalorder %s28, 0
      %p228 = por %p226, %p227
      %s229 = ssub.s32 %s29, %s41
      %p230 = scmp.eq.s32.totalorder %s229, 0
      %s232 = sadd.s32 %s231, 1
      %s233 = scalar_select %p230, %s231, %s232
      %p236 = pneg %p230
      %p237 = scmp.eq.s32.totalorder %s22, 1
      %p238 = por %p236, %p237
      %p239 = scmp.ne.s32.totalorder %s231, %s234
      %p240 = scmp.eq.s32.totalorder %s22, 0
      %p241 = por %p239, %p240
      %p242 = scmp.ne.s32.totalorder %s231, %s234
      %p243 = scmp.eq.s32.totalorder %s27, 1
      %p244 = por %p242, %p243
      %p245 = scmp.ne.s32.totalorder %s234, %s235
      %p246 = scmp.eq.s32.totalorder %s27, 0
      %p247 = por %p245, %p246
      %p248 = scmp.ne.s32.totalorder %s234, %s235
      %p249 = scmp.eq.s32.totalorder %s28, 1
      %p250 = por %p248, %p249
      %p252 = scmp.ne.s32.totalorder %s235, %s251
      %p253 = scmp.eq.s32.totalorder %s28, 0
      %p254 = por %p252, %p253
      %p255 = scmp.le.s32.totalorder 1, %s22
      %p256 = scmp.lt.s32.totalorder %s22, 3
      %p257 = pnand %p255, %p256
      %p258 = pneg %p257
      // Predicated region
      $region9: #{tpu_custom_call.1} parent=5 // pred_check
        _
      $region10: #{tpu_custom_call.1} parent=5 // pred_check_branch
        %260 = sbr.rel (%p257) target = $region12
      $region11: #{tpu_custom_call.1} parent=5 // pred_region
        %s261 = ssub.s32 %s22, 1
        // Predicated region
        $region13: #{tpu_custom_call.1} parent=11 // pred_check
          %p262 = pneg %p137
        $region14: #{tpu_custom_call.1} parent=11 // pred_check_branch
          %264 = sbr.rel (%p262) target = $region16
        $region15: #{tpu_custom_call.1} parent=11 // pred_region
          _
        $region16: #{tpu_custom_call.1} parent=11 // pred_fallthru
          _
        // Predicated region
        $region17: #{tpu_custom_call.1} parent=11 // pred_check
          %p265 = pneg %p158
        $region18: #{tpu_custom_call.1} parent=11 // pred_check_branch
          %267 = sbr.rel (%p265) target = $region20
        $region19: #{tpu_custom_call.1} parent=11 // pred_region
          _
        $region20: #{tpu_custom_call.1} parent=11 // pred_fallthru
          _
        // Predicated region
        $region21: #{tpu_custom_call.1} parent=11 // pred_check
          %p268 = pneg %p179
        $region22: #{tpu_custom_call.1} parent=11 // pred_check_branch
          %270 = sbr.rel (%p268) target = $region24
        $region23: #{tpu_custom_call.1} parent=11 // pred_region
          _
        $region24: #{tpu_custom_call.1} parent=11 // pred_fallthru
          _
        // Predicated region
        $region25: #{tpu_custom_call.1} parent=11 // pred_check
          %p271 = pneg %p200
        $region26: #{tpu_custom_call.1} parent=11 // pred_check_branch
          %273 = sbr.rel (%p271) target = $region28
        $region27: #{tpu_custom_call.1} parent=11 // pred_region
          _
        $region28: #{tpu_custom_call.1} parent=11 // pred_fallthru
          _
        // Predicated region
        $region29: #{tpu_custom_call.1} parent=11 // pred_check
          %p274 = pneg %p221
        $region30: #{tpu_custom_call.1} parent=11 // pred_check_branch
          %276 = sbr.rel (%p274) target = $region32
        $region31: #{tpu_custom_call.1} parent=11 // pred_region
          _
        $region32: #{tpu_custom_call.1} parent=11 // pred_fallthru
          _
      $region12: #{tpu_custom_call.1} parent=5 // pred_fallthru
        _
      %p277 = scmp.lt.s32.totalorder %s22, 2
      // Predicated region
      $region33: #{tpu_custom_call.1} parent=5 // pred_check
        %p278 = pneg %p277
      $region34: #{tpu_custom_call.1} parent=5 // pred_check_branch
        %280 = sbr.rel (%p278) target = $region36
      $region35: #{tpu_custom_call.1} parent=5 // pred_region
        // Predicated region
        $region37: #{tpu_custom_call.1} parent=35 // pred_check
          %p281 = pneg %p54
        $region38: #{tpu_custom_call.1} parent=35 // pred_check_branch
          %283 = sbr.rel (%p281) target = $region40
        $region39: #{tpu_custom_call.1} parent=35 // pred_region
          %p284 = scmp.lt.s32.totalorder %s29, 1
          %s285 = scalar_select %p284, %s29, 1
          %s286 = smul.addr %s285, 8
          %s287 = scalar_lea.vmem %s0, %s286
        $region40: #{tpu_custom_call.1} parent=35 // pred_fallthru
          _
        // Predicated region
        $region41: #{tpu_custom_call.1} parent=35 // pred_check
          %p288 = pneg %p82
        $region42: #{tpu_custom_call.1} parent=35 // pred_check_branch
          %290 = sbr.rel (%p288) target = $region44
        $region43: #{tpu_custom_call.1} parent=35 // pred_region
          %s291 = sand.u32 %s72, 1
          %s292 = scalar_lea.sflag [#allocation5], %s291
          %s293 = sand.u32 %s72, 1
          %s294 = smul.addr %s293, 64
          %s295 = scalar_lea.vmem [#allocation4], %s294
          %s296 = smul.u32 8, %s29
          %298 = vsyncadd %s292, 0
          %s299 = sadd.s32 %s30, %s296
          %s300 = smul.addr %s299, 8
          %s301 = scalar_lea.hbm %s1, %s300
          %s302 = sshll.u32 %s301, 4
          %s303 = int_to_ptr.hbm [resolvable:$true] %s302
          %s304 = sshll.u32 %s295, 4
          %s305 = int_to_ptr.vmem [resolvable:$true] %s304
          %310 = dma.hbm_to_vmem [thread:$0]  %s303, 1024, %s305, %s292, 128, 128, 8
        $region44: #{tpu_custom_call.1} parent=35 // pred_fallthru
          _
        // Predicated region
        $region45: #{tpu_custom_call.1} parent=35 // pred_check
          %p311 = pneg %p110
        $region46: #{tpu_custom_call.1} parent=35 // pred_check_branch
          %313 = sbr.rel (%p311) target = $region48
        $region47: #{tpu_custom_call.1} parent=35 // pred_region
          %p314 = scmp.lt.s32.totalorder %s29, 1
          %s315 = scalar_select %p314, %s29, 1
          %p316 = scmp.lt.s32.totalorder %s30, 0
          %s317 = scalar_select %p316, %s30, 0
          %s318 = sadd.s32 %s317, %s315
          %s319 = smul.addr %s318, 8
          %s320 = scalar_lea.vmem %s2, %s319
        $region48: #{tpu_custom_call.1} parent=35 // pred_fallthru
          _
      $region36: #{tpu_custom_call.1} parent=5 // pred_fallthru
        _
      %p321 = scmp.le.s32.totalorder 1, %s22
      %p322 = scmp.lt.s32.totalorder %s22, 3
      %p323 = pnand %p321, %p322
      %p324 = pneg %p323
      // Predicated region
      $region49: #{tpu_custom_call.1} parent=5 // pred_check
        _
      $region50: #{tpu_custom_call.1} parent=5 // pred_check_branch
        %326 = sbr.rel (%p323) target = $region52
      $region51: #{tpu_custom_call.1} parent=5 // pred_region
        %s327 = ssub.s32 %s22, 1
        %s328 = sand.u32 %s75, 1
        %s329 = scalar_lea.sflag [#allocation5], %s328
        %s330 = sand.u32 %s75, 1
        %s331 = smul.addr %s330, 64
        %s332 = scalar_lea.vmem [#allocation4], %s331
        // Predicated region
        $region53: #{tpu_custom_call.1} parent=51 // pred_check
          %p333 = pneg %p88
        $region54: #{tpu_custom_call.1} parent=51 // pred_check_branch
          %335 = sbr.rel (%p333) target = $region56
        $region55: #{tpu_custom_call.1} parent=51 // pred_region
          %337 = dma.done %s329, 1024
        $region56: #{tpu_custom_call.1} parent=51 // pred_fallthru
          _
        %p338 = scmp.lt.s32.totalorder %s31, 1
        %s339 = scalar_select %p338, %s31, 1
        %s340 = smul.addr %s339, 8
        %s341 = scalar_lea.vmem %s0, %s340
        %p342 = pneg %p60
        %p343 = pneg %p57
        %s344 = sand.u32 %s75, 1
        %s345 = scalar_lea.sflag [#allocation5], %s344
        %s346 = sand.u32 %s75, 1
        %s347 = smul.addr %s346, 64
        %s348 = scalar_lea.vmem [#allocation4], %s347
        %p349 = pneg %p88
        %p350 = pneg %p85
        %p351 = scmp.lt.s32.totalorder %s31, 1
        %s352 = scalar_select %p351, %s31, 1
        %p353 = scmp.lt.s32.totalorder %s32, 0
        %s354 = scalar_select %p353, %s32, 0
        %s355 = sadd.s32 %s354, %s352
        %s356 = smul.addr %s355, 8
        %s357 = scalar_lea.vmem %s2, %s356
        %p358 = pneg %p116
        %p359 = pneg %p113
        %p360 = pneg %p137
        %p361 = pneg %p134
        %p362 = pneg %p158
        %p363 = pneg %p155
        %p364 = pneg %p179
        %p365 = pneg %p176
        %p366 = pneg %p200
        %p367 = pneg %p197
        %p368 = pneg %p221
        %p369 = pneg %p218
        %p370 = pneg %p247
        %p371 = pneg %p244
        %s372 = sand.u32 %s234, 1
        %s373 = scalar_lea.sflag [#allocation6], %s372
        %s374 = sand.u32 %s234, 1
        %s375 = smul.addr %s374, 8
        %s376 = scalar_lea.vmem [#allocation7], %s375
        %p377 = scmp.lt.s32.totalorder %s31, 1
        %s378 = scalar_select %p377, %s31, 1
        %s379 = smul.addr %s378, 8
        %s380 = scalar_lea.vmem %s0, %s379
        %s381 = smul.u32 8, %s31
        %p382 = scmp.lt.s32.totalorder %s31, 1
        %s383 = scalar_select %p382, %s31, 1
        %p384 = scmp.lt.s32.totalorder %s32, 0
        %s385 = scalar_select %p384, %s32, 0
        %s386 = sadd.s32 %s385, %s383
        %s387 = smul.addr %s386, 8
        %s388 = scalar_lea.vmem %s2, %s387
        %p390 = scmp.eq.s32.totalorder %s32, 0
        // Predicated region
        $region57: #{tpu_custom_call.1} parent=51 // pred_check
          %p391 = pneg %p390
        $region58: #{tpu_custom_call.1} parent=51 // pred_check_branch
          %393 = sbr.rel (%p391) target = $region60
        $region59: #{tpu_custom_call.1} parent=51 // pred_region
          %vm394 = vcmask 523264
          %395 = vst.msk [vmem:[%s376] sm:$0xff] %vm394, 0.0
          %v396 = vld [vmem:[%s380] sm:$0xff]
          %v397 = vpack.c.bf16 %v396, %v396
          %v398 = vld [vmem:[%s4] sm:$0xf]
          %v399 = vld [vmem:[%s4 + $0x4] sm:$0xf]
          %v400 = vld [vmem:[%s4 + $0x8] sm:$0xf]
          %v401 = vld [vmem:[%s4 + $0xc] sm:$0xf]
          %v402 = vld [vmem:[%s4 + $0x10] sm:$0xf]
          %v403 = vld [vmem:[%s4 + $0x14] sm:$0xf]
          %v404 = vld [vmem:[%s4 + $0x18] sm:$0xf]
          %v405 = vld [vmem:[%s4 + $0x1c] sm:$0xf]
          %v406 = vld [vmem:[%s5] sm:$0x1]
          %v408 = vperm.slane %v406, 0
          %v418 = vunpack.c.l.b16 %v398
          %v419 = vunpack.c.l.b16 %v399
          %v420 = vunpack.c.l.b16 %v400
          %v421 = vunpack.c.l.b16 %v401
          %v422 = vunpack.c.l.b16 %v402
          %v423 = vunpack.c.l.b16 %v403
          %v424 = vunpack.c.l.b16 %v404
          %v425 = vunpack.c.l.b16 %v405
          %v426 = vpack.c.b16 %v419, %v418
          %v427 = vpack.c.b16 %v421, %v420
          %v428 = vpack.c.b16 %v423, %v422
          %v429 = vpack.c.b16 %v425, %v424
          %v435 = vsel %vm394, %v397, 0
          %437 = vmatpush.bf16.msra.mxu0 0
          %438 = vmatpush.bf16.msra.mxu0 0
          %439 = vmatpush.bf16.msra.mxu0 0
          %440 = vmatpush.bf16.msra.mxu0 0
          %441 = vmatpush.bf16.msra.mxu0 %v429
          %442 = vmatpush.bf16.msra.mxu0 %v428
          %443 = vmatpush.bf16.msra.mxu0 %v427
          %444 = vmatpush.bf16.msra.mxu0 %v426
          %445 = vmatmul.bf16.gmra.mxu0 %v435
          %v446 = vpop.f32.mrf.mxu0
          %v447 = vadd.f32 %v408, %v446
          %v448 = vpop.f32.mrf.mxu0
          %449 = vdwg.mxu0
          %vm450 = vcmask 261120
          %451 = vst.msk [vmem:[#allocation2] sm:$0xff] %vm450, %v447
        $region60: #{tpu_custom_call.1} parent=51 // pred_fallthru
          _
        %v452 = vld [vmem:[%s332] sm:$0xff]
        %v453 = vld [vmem:[%s332 + $0x8] sm:$0xff]
        %v454 = vld [vmem:[%s332 + $0x10] sm:$0xff]
        %v455 = vld [vmem:[%s332 + $0x18] sm:$0xff]
        %v456 = vld [vmem:[%s332 + $0x20] sm:$0xff]
        %v457 = vld [vmem:[%s332 + $0x28] sm:$0xff]
        %v458 = vld [vmem:[%s332 + $0x30] sm:$0xff]
        %v459 = vld [vmem:[%s332 + $0x38] sm:$0xff]
        %v460 = vpack.c.bf16 %v452, %v452
        %v461 = vpack.c.bf16 %v453, %v453
        %v462 = vpack.c.bf16 %v454, %v454
        %v463 = vpack.c.bf16 %v455, %v455
        %v464 = vpack.c.bf16 %v456, %v456
        %v465 = vpack.c.bf16 %v457, %v457
        %v466 = vpack.c.bf16 %v458, %v458
        %v467 = vpack.c.bf16 %v459, %v459
        %v468 = vld [vmem:[%s380] sm:$0xff]
        %v469 = vpack.c.bf16 %v468, %v468
        %v471 = vrot.slane %v469, 3
        %vm472 = vcmask 1040384
        %v475 = vsel %vm472, %v469, %v471
        %vm477 = vcmask 1041409
        %v478 = vsel %vm477, %v469, %v471
        %v480 = vrot.slane %v478, 1
        %vm481 = vcmask 1042434
        %v482 = vsel %vm481, %v469, %v471
        %v484 = vrot.slane %v482, 2
        %vm485 = vcmask 1043459
        %v486 = vsel %vm485, %v469, %v471
        %v488 = vrot.slane %v486, 3
        %v489 = vunpack.i.l.s16 %v475
        %v490 = vunpack.i.h.s16 %v475
        %v491 = vunpack.i.l.s16 %v480
        %v492 = vunpack.i.h.s16 %v480
        %v493 = vunpack.i.l.s16 %v484
        %v494 = vunpack.i.h.s16 %v484
        %v495 = vunpack.i.l.s16 %v488
        %v496 = vunpack.i.h.s16 %v488
        %v497 = vpack.i.b16 %v489, %v489
        %v498 = vpack.i.b16 %v490, %v490
        %v499 = vpack.i.b16 %v491, %v491
        %v500 = vpack.i.b16 %v492, %v492
        %v501 = vpack.i.b16 %v493, %v493
        %v502 = vpack.i.b16 %v494, %v494
        %v503 = vpack.i.b16 %v495, %v495
        %v504 = vpack.i.b16 %v496, %v496
        %v505 = vperm.slane %v497, 0
        %v506 = vperm.slane %v498, 0
        %v507 = vperm.slane %v499, 0
        %v508 = vperm.slane %v500, 0
        %v509 = vperm.slane %v501, 0
        %v510 = vperm.slane %v502, 0
        %v511 = vperm.slane %v503, 0
        %v512 = vperm.slane %v504, 0
        %v514 = vpack.i.b16 %v505, %v505
        %v516 = vperm.slane %v514, 0
        %v518 = vpack.i.b16 %v506, %v506
        %v520 = vperm.slane %v518, 0
        %v522 = vpack.i.b16 %v507, %v507
        %v524 = vperm.slane %v522, 0
        %v526 = vpack.i.b16 %v508, %v508
        %v528 = vperm.slane %v526, 0
        %v530 = vpack.i.b16 %v509, %v509
        %v532 = vperm.slane %v530, 0
        %v534 = vpack.i.b16 %v510, %v510
        %v536 = vperm.slane %v534, 0
        %v538 = vpack.i.b16 %v511, %v511
        %v540 = vperm.slane %v538, 0
        %v542 = vpack.i.b16 %v512, %v512
        %v544 = vperm.slane %v542, 0
        %v545 = vunpack.c.l.bf16 %v516
        %v546 = vunpack.c.l.bf16 %v520
        %v547 = vunpack.c.l.bf16 %v524
        %v548 = vunpack.c.l.bf16 %v528
        %v549 = vunpack.c.l.bf16 %v532
        %v550 = vunpack.c.l.bf16 %v536
        %v551 = vunpack.c.l.bf16 %v540
        %v552 = vunpack.c.l.bf16 %v544
        %v553 = vunpack.c.l.bf16 %v460
        %v554 = vunpack.c.l.bf16 %v461
        %v555 = vunpack.c.l.bf16 %v462
        %v556 = vunpack.c.l.bf16 %v463
        %v557 = vunpack.c.l.bf16 %v464
        %v558 = vunpack.c.l.bf16 %v465
        %v559 = vunpack.c.l.bf16 %v466
        %v560 = vunpack.c.l.bf16 %v467
        %v561 = vmul.f32 %v545, %v553
        %v562 = vmul.f32 %v546, %v554
        %v563 = vmul.f32 %v547, %v555
        %v564 = vmul.f32 %v548, %v556
        %v565 = vmul.f32 %v549, %v557
        %v566 = vmul.f32 %v550, %v558
        %v567 = vmul.f32 %v551, %v559
        %v568 = vmul.f32 %v552, %v560
        %v569 = vpack.c.bf16 %v561, %v561
        %v570 = vpack.c.bf16 %v562, %v562
        %v571 = vpack.c.bf16 %v563, %v563
        %v572 = vpack.c.bf16 %v564, %v564
        %v573 = vpack.c.bf16 %v565, %v565
        %v574 = vpack.c.bf16 %v566, %v566
        %v575 = vpack.c.bf16 %v567, %v567
        %v576 = vpack.c.bf16 %v568, %v568
        %v585 = vunpack.c.l.b16 %v569
        %v586 = vunpack.c.l.b16 %v570
        %v587 = vunpack.c.l.b16 %v571
        %v588 = vunpack.c.l.b16 %v572
        %v589 = vunpack.c.l.b16 %v573
        %v590 = vunpack.c.l.b16 %v574
        %v591 = vunpack.c.l.b16 %v575
        %v592 = vunpack.c.l.b16 %v576
        %v593 = vpack.c.b16 %v585, %v585
        %v594 = vpack.c.b16 %v586, %v586
        %v595 = vpack.c.b16 %v587, %v587
        %v596 = vpack.c.b16 %v588, %v588
        %v597 = vpack.c.b16 %v589, %v589
        %v598 = vpack.c.b16 %v590, %v590
        %v599 = vpack.c.b16 %v591, %v591
        %v600 = vpack.c.b16 %v592, %v592
        %601 = vrot.lane.b32.xlu0 %v593, 64
        %v602 = vpop.permute.xlu0 %601
        %603 = vrot.lane.b32.xlu0 %v594, 64
        %v604 = vpop.permute.xlu0 %603
        %605 = vrot.lane.b32.xlu0 %v595, 64
        %v606 = vpop.permute.xlu0 %605
        %607 = vrot.lane.b32.xlu0 %v596, 64
        %v608 = vpop.permute.xlu0 %607
        %609 = vrot.lane.b32.xlu0 %v597, 64
        %v610 = vpop.permute.xlu0 %609
        %611 = vrot.lane.b32.xlu0 %v598, 64
        %v612 = vpop.permute.xlu0 %611
        %613 = vrot.lane.b32.xlu0 %v599, 64
        %v614 = vpop.permute.xlu0 %613
        %615 = vrot.lane.b32.xlu0 %v600, 64
        %v616 = vpop.permute.xlu0 %615
        %vm617 = vcmask 523264
        %v620 = vsel %vm617, %v460, %v602
        %v623 = vsel %vm617, %v461, %v604
        %v626 = vsel %vm617, %v462, %v606
        %v629 = vsel %vm617, %v463, %v608
        %v632 = vsel %vm617, %v464, %v610
        %v635 = vsel %vm617, %v465, %v612
        %v638 = vsel %vm617, %v466, %v614
        %v641 = vsel %vm617, %v467, %v616
        %v642 = vld [vmem:[%s3] sm:$0xf]
        %v643 = vld [vmem:[%s3 + $0x4] sm:$0xf]
        %v644 = vld [vmem:[%s3 + $0x8] sm:$0xf]
        %v645 = vld [vmem:[%s3 + $0xc] sm:$0xf]
        %v646 = vld [vmem:[%s3 + $0x10] sm:$0xf]
        %v647 = vld [vmem:[%s3 + $0x14] sm:$0xf]
        %v648 = vld [vmem:[%s3 + $0x18] sm:$0xf]
        %v649 = vld [vmem:[%s3 + $0x1c] sm:$0xf]
        %v650 = vld [vmem:[%s3 + $0x20] sm:$0xf]
        %v651 = vld [vmem:[%s3 + $0x24] sm:$0xf]
        %v652 = vld [vmem:[%s3 + $0x28] sm:$0xf]
        %v653 = vld [vmem:[%s3 + $0x2c] sm:$0xf]
        %v654 = vld [vmem:[%s3 + $0x30] sm:$0xf]
        %v655 = vld [vmem:[%s3 + $0x34] sm:$0xf]
        %v656 = vld [vmem:[%s3 + $0x38] sm:$0xf]
        %v657 = vld [vmem:[%s3 + $0x3c] sm:$0xf]
        %v658 = vld [vmem:[#allocation2] sm:$0xff]
        %v660 = vrot.slane %v658, 1
        %v661 = vrot.slane %v658, 2
        %v662 = vrot.slane %v658, 3
        %v663 = vrot.slane %v658, 4
        %v664 = vrot.slane %v658, 5
        %v665 = vrot.slane %v658, 6
        %v666 = vrot.slane %v658, 7
        %v667 = vperm.slane %v658, 0
        %v668 = vperm.slane %v660, 0
        %v669 = vperm.slane %v661, 0
        %v670 = vperm.slane %v662, 0
        %v671 = vperm.slane %v663, 0
        %v672 = vperm.slane %v664, 0
        %v673 = vperm.slane %v665, 0
        %v674 = vperm.slane %v666, 0
        %v691 = vunpack.c.l.b16 %v620
        %v692 = vunpack.c.l.b16 %v623
        %v693 = vunpack.c.l.b16 %v626
        %v694 = vunpack.c.l.b16 %v629
        %v695 = vunpack.c.l.b16 %v632
        %v696 = vunpack.c.l.b16 %v635
        %v697 = vunpack.c.l.b16 %v638
        %v698 = vunpack.c.l.b16 %v641
        %v699 = vpack.c.b16 %v692, %v691
        %v700 = vpack.c.b16 %v694, %v693
        %v701 = vpack.c.b16 %v696, %v695
        %v702 = vpack.c.b16 %v698, %v697
        %v723 = vunpack.c.l.b16 %v642
        %v724 = vunpack.c.l.b16 %v643
        %v725 = vunpack.c.l.b16 %v644
        %v726 = vunpack.c.l.b16 %v645
        %v727 = vunpack.c.l.b16 %v646
        %v728 = vunpack.c.l.b16 %v647
        %v729 = vunpack.c.l.b16 %v648
        %v730 = vunpack.c.l.b16 %v649
        %v731 = vunpack.c.l.b16 %v650
        %v732 = vunpack.c.l.b16 %v651
        %v733 = vunpack.c.l.b16 %v652
        %v734 = vunpack.c.l.b16 %v653
        %v735 = vunpack.c.l.b16 %v654
        %v736 = vunpack.c.l.b16 %v655
        %v737 = vunpack.c.l.b16 %v656
        %v738 = vunpack.c.l.b16 %v657
        %v739 = vpack.c.b16 %v724, %v723
        %v740 = vpack.c.b16 %v726, %v725
        %v741 = vpack.c.b16 %v728, %v727
        %v742 = vpack.c.b16 %v730, %v729
        %v743 = vpack.c.b16 %v732, %v731
        %v744 = vpack.c.b16 %v734, %v733
        %v745 = vpack.c.b16 %v736, %v735
        %v746 = vpack.c.b16 %v738, %v737
        %755 = vmatpush.bf16.msra.mxu0 %v746
        %756 = vmatpush.bf16.msra.mxu0 %v745
        %757 = vmatpush.bf16.msra.mxu0 %v744
        %758 = vmatpush.bf16.msra.mxu0 %v743
        %759 = vmatpush.bf16.msra.mxu0 %v742
        %760 = vmatpush.bf16.msra.mxu0 %v741
        %761 = vmatpush.bf16.msra.mxu0 %v740
        %762 = vmatpush.bf16.msra.mxu0 %v739
        %763 = vmatmul.bf16.gmra.mxu0 %v699
        %v764 = vpop.f32.mrf.mxu0
        %v765 = vadd.f32 %v667, %v764
        %v766 = vpop.f32.mrf.mxu0
        %v767 = vadd.f32 %v668, %v766
        %768 = vmatmul.bf16.gmra.mxu0 %v700
        %v769 = vpop.f32.mrf.mxu0
        %v770 = vadd.f32 %v669, %v769
        %v771 = vpop.f32.mrf.mxu0
        %v772 = vadd.f32 %v670, %v771
        %773 = vmatmul.bf16.gmra.mxu0 %v701
        %v774 = vpop.f32.mrf.mxu0
        %v775 = vadd.f32 %v671, %v774
        %v776 = vpop.f32.mrf.mxu0
        %v777 = vadd.f32 %v672, %v776
        %778 = vmatmul.bf16.gmra.mxu0 %v702
        %v779 = vpop.f32.mrf.mxu0
        %v780 = vadd.f32 %v673, %v779
        %v781 = vpop.f32.mrf.mxu0
        %v782 = vadd.f32 %v674, %v781
        %783 = vdwg.mxu0
        %v784 = vmax.f32 %v765, 0.0
        %v785 = vmax.f32 %v767, 0.0
        %v786 = vmax.f32 %v770, 0.0
        %v787 = vmax.f32 %v772, 0.0
        %v788 = vmax.f32 %v775, 0.0
        %v789 = vmax.f32 %v777, 0.0
        %v790 = vmax.f32 %v780, 0.0
        %v791 = vmax.f32 %v782, 0.0
        %v792 = vld [vmem:[%s6] sm:$0x1]
        %v794 = vperm.slane %v792, 0
        %v796 = vmul.f32 %v784, %v794
        %v797 = vmul.f32 %v785, %v794
        %v798 = vmul.f32 %v786, %v794
        %v799 = vmul.f32 %v787, %v794
        %v800 = vmul.f32 %v788, %v794
        %v801 = vmul.f32 %v789, %v794
        %v802 = vmul.f32 %v790, %v794
        %v803 = vmul.f32 %v791, %v794
        %vm804 = vcmask 261120
        %v805 = vsel %vm804, %v796, 0.0
        %806 = vadd.xlane.f32.xlu0 %v805
        %v807 = vpop.xlane.xlu0 %806
        %v808 = vsel %vm804, %v797, 0.0
        %809 = vadd.xlane.f32.xlu0 %v808
        %v810 = vpop.xlane.xlu0 %809
        %v811 = vsel %vm804, %v798, 0.0
        %812 = vadd.xlane.f32.xlu0 %v811
        %v813 = vpop.xlane.xlu0 %812
        %v814 = vsel %vm804, %v799, 0.0
        %815 = vadd.xlane.f32.xlu0 %v814
        %v816 = vpop.xlane.xlu0 %815
        %v817 = vsel %vm804, %v800, 0.0
        %818 = vadd.xlane.f32.xlu0 %v817
        %v819 = vpop.xlane.xlu0 %818
        %v820 = vsel %vm804, %v801, 0.0
        %821 = vadd.xlane.f32.xlu0 %v820
        %v822 = vpop.xlane.xlu0 %821
        %v823 = vsel %vm804, %v802, 0.0
        %824 = vadd.xlane.f32.xlu0 %v823
        %v825 = vpop.xlane.xlu0 %824
        %v826 = vsel %vm804, %v803, 0.0
        %827 = vadd.xlane.f32.xlu0 %v826
        %v828 = vpop.xlane.xlu0 %827
        %v829 = vld [vmem:[#allocation3] sm:$0x1]
        %s830 = vtos %v829
        %v831 = vstv %s830
        %v832 = vadd.f32 %v807, %v831
        %v833 = vadd.f32 %v810, %v831
        %v834 = vadd.f32 %v813, %v831
        %v835 = vadd.f32 %v816, %v831
        %v836 = vadd.f32 %v819, %v831
        %v837 = vadd.f32 %v822, %v831
        %v838 = vadd.f32 %v825, %v831
        %v839 = vadd.f32 %v828, %v831
        %v840 = vld [vmem:[%s388] sm:$0xff]
        %v841 = vperm.slane %v840, 0
        %v842 = vlaneseq
        %v843 = vshrl.u32 %v842, 7
        %845 = vset.pattern.permute.xlu0 %v843
        %846 = vperm.xlu0 %845, %v841
        %v847 = vpop.permute.xlu0 %846
        %v848 = vperm.slane %v840, 1
        %v849 = vlaneseq
        %v850 = vshrl.u32 %v849, 7
        %852 = vset.pattern.permute.xlu0 %v850
        %853 = vperm.xlu0 %852, %v848
        %v854 = vpop.permute.xlu0 %853
        %v855 = vperm.slane %v840, 2
        %v856 = vlaneseq
        %v857 = vshrl.u32 %v856, 7
        %859 = vset.pattern.permute.xlu0 %v857
        %860 = vperm.xlu0 %859, %v855
        %v861 = vpop.permute.xlu0 %860
        %v862 = vperm.slane %v840, 3
        %v863 = vlaneseq
        %v864 = vshrl.u32 %v863, 7
        %866 = vset.pattern.permute.xlu0 %v864
        %867 = vperm.xlu0 %866, %v862
        %v868 = vpop.permute.xlu0 %867
        %v869 = vperm.slane %v840, 4
        %v870 = vlaneseq
        %v871 = vshrl.u32 %v870, 7
        %873 = vset.pattern.permute.xlu0 %v871
        %874 = vperm.xlu0 %873, %v869
        %v875 = vpop.permute.xlu0 %874
        %v876 = vperm.slane %v840, 5
        %v877 = vlaneseq
        %v878 = vshrl.u32 %v877, 7
        %880 = vset.pattern.permute.xlu0 %v878
        %881 = vperm.xlu0 %880, %v876
        %v882 = vpop.permute.xlu0 %881
        %v883 = vperm.slane %v840, 6
        %v884 = vlaneseq
        %v885 = vshrl.u32 %v884, 7
        %887 = vset.pattern.permute.xlu0 %v885
        %888 = vperm.xlu0 %887, %v883
        %v889 = vpop.permute.xlu0 %888
        %v890 = vperm.slane %v840, 7
        %v891 = vlaneseq
        %v892 = vshrl.u32 %v891, 7
        %894 = vset.pattern.permute.xlu0 %v892
        %895 = vperm.xlu0 %894, %v890
        %v896 = vpop.permute.xlu0 %895
        %v897 = vmul.f32 %v832, %v847
        %v898 = vmul.f32 %v833, %v854
        %v899 = vmul.f32 %v834, %v861
        %v900 = vmul.f32 %v835, %v868
        %v901 = vmul.f32 %v836, %v875
        %v902 = vmul.f32 %v837, %v882
        %v903 = vmul.f32 %v838, %v889
        %v904 = vmul.f32 %v839, %v896
        %v905 = vld [vmem:[%s376] sm:$0xff]
        %v906 = vmul.f32 %v897, %v452
        %v907 = vmul.f32 %v898, %v453
        %v908 = vmul.f32 %v899, %v454
        %v909 = vmul.f32 %v900, %v455
        %v910 = vmul.f32 %v901, %v456
        %v911 = vmul.f32 %v902, %v457
        %v912 = vmul.f32 %v903, %v458
        %v913 = vmul.f32 %v904, %v459
        %v914 = vsel %vm617, %v906, 0.0
        %v915 = vrot.slane %v914, 4
        %v916 = vadd.f32 %v914, %v915
        %v917 = vrot.slane %v916, 2
        %v918 = vadd.f32 %v916, %v917
        %v919 = vrot.slane %v918, 1
        %v920 = vadd.f32 %v918, %v919
        %v921 = vsel %vm617, %v907, 0.0
        %v922 = vrot.slane %v921, 4
        %v923 = vadd.f32 %v921, %v922
        %v924 = vrot.slane %v923, 2
        %v925 = vadd.f32 %v923, %v924
        %v926 = vrot.slane %v925, 1
        %v927 = vadd.f32 %v925, %v926
        %v928 = vsel %vm617, %v908, 0.0
        %v929 = vrot.slane %v928, 4
        %v930 = vadd.f32 %v928, %v929
        %v931 = vrot.slane %v930, 2
        %v932 = vadd.f32 %v930, %v931
        %v933 = vrot.slane %v932, 1
        %v934 = vadd.f32 %v932, %v933
        %v935 = vsel %vm617, %v909, 0.0
        %v936 = vrot.slane %v935, 4
        %v937 = vadd.f32 %v935, %v936
        %v938 = vrot.slane %v937, 2
        %v939 = vadd.f32 %v937, %v938
        %v940 = vrot.slane %v939, 1
        %v941 = vadd.f32 %v939, %v940
        %v942 = vsel %vm617, %v910, 0.0
        %v943 = vrot.slane %v942, 4
        %v944 = vadd.f32 %v942, %v943
        %v945 = vrot.slane %v944, 2
        %v946 = vadd.f32 %v944, %v945
        %v947 = vrot.slane %v946, 1
        %v948 = vadd.f32 %v946, %v947
        %v949 = vsel %vm617, %v911, 0.0
        %v950 = vrot.slane %v949, 4
        %v951 = vadd.f32 %v949, %v950
        %v952 = vrot.slane %v951, 2
        %v953 = vadd.f32 %v951, %v952
        %v954 = vrot.slane %v953, 1
        %v955 = vadd.f32 %v953, %v954
        %v956 = vsel %vm617, %v912, 0.0
        %v957 = vrot.slane %v956, 4
        %v958 = vadd.f32 %v956, %v957
        %v959 = vrot.slane %v958, 2
        %v960 = vadd.f32 %v958, %v959
        %v961 = vrot.slane %v960, 1
        %v962 = vadd.f32 %v960, %v961
        %v963 = vsel %vm617, %v913, 0.0
        %v964 = vrot.slane %v963, 4
        %v965 = vadd.f32 %v963, %v964
        %v966 = vrot.slane %v965, 2
        %v967 = vadd.f32 %v965, %v966
        %v968 = vrot.slane %v967, 1
        %v969 = vadd.f32 %v967, %v968
        %v978 = vsel %vm477, %v927, %v920
        %v979 = vsel %vm481, %v934, %v978
        %v980 = vsel %vm485, %v941, %v979
        %vm981 = vcmask 1044484
        %v982 = vsel %vm981, %v948, %v980
        %vm983 = vcmask 1045509
        %v984 = vsel %vm983, %v955, %v982
        %vm985 = vcmask 1046534
        %v986 = vsel %vm985, %v962, %v984
        %vm987 = vcmask 1047559
        %v988 = vsel %vm987, %v969, %v986
        %v990 = vadd.f32 %v905, %v988
        %991 = vst.msk [vmem:[%s376] sm:$0xff] %vm617, %v990
        %s992 = sand.u32 %s234, 1
        %s993 = scalar_lea.sflag [#allocation6], %s992
        %s994 = sand.u32 %s234, 1
        %s995 = smul.addr %s994, 8
        %s996 = scalar_lea.vmem [#allocation7], %s995
        // Predicated region
        $region61: #{tpu_custom_call.1} parent=51 // pred_check
          %p997 = pneg %p244
        $region62: #{tpu_custom_call.1} parent=51 // pred_check_branch
          %999 = sbr.rel (%p997) target = $region64
        $region63: #{tpu_custom_call.1} parent=51 // pred_region
          %1001 = vsyncadd %s993, 0
          %s1002 = smul.addr %s31, 8
          %s1003 = scalar_lea.hbm %s8, %s1002
          %s1005 = sshll.u32 %s996, 4
          %s1006 = int_to_ptr.vmem [resolvable:$true] %s1005
          %s1007 = sshll.u32 %s1003, 4
          %s1008 = int_to_ptr.hbm [resolvable:$true] %s1007
          %1010 = dma.vmem_to_hbm [thread:$0]  %s1006, 128, %s1008, %s993
        $region64: #{tpu_custom_call.1} parent=51 // pred_fallthru
          _
      $region52: #{tpu_custom_call.1} parent=5 // pred_fallthru
        _
      %p1011 = scmp.le.s32.totalorder 2, %s22
      // Predicated region
      $region65: #{tpu_custom_call.1} parent=5 // pred_check
        %p1012 = pneg %p1011
      $region66: #{tpu_custom_call.1} parent=5 // pred_check_branch
        %1014 = sbr.rel (%p1012) target = $region68
      $region67: #{tpu_custom_call.1} parent=5 // pred_region
        %s1015 = ssub.s32 %s22, 2
        // Predicated region
        $region69: #{tpu_custom_call.1} parent=67 // pred_check
          %p1016 = pneg %p250
        $region70: #{tpu_custom_call.1} parent=67 // pred_check_branch
          %1018 = sbr.rel (%p1016) target = $region72
        $region71: #{tpu_custom_call.1} parent=67 // pred_region
          %s1019 = sand.u32 %s235, 1
          %s1020 = scalar_lea.sflag [#allocation6], %s1019
          %s1021 = sand.u32 %s235, 1
          %s1022 = smul.addr %s1021, 8
          %s1023 = scalar_lea.vmem [#allocation7], %s1022
          %1025 = dma.done %s1020, 128
        $region72: #{tpu_custom_call.1} parent=67 // pred_fallthru
          _
      $region68: #{tpu_custom_call.1} parent=5 // pred_fallthru
        _
    $region6: #{tpu_custom_call.1} parent=1 // loop_footer
      %s26 = sadd.s32 1, %s22
    $region7: #{tpu_custom_call.1} parent=1 // loop_footer_branch
      %21 = sbr.rel target = $region3
    $region8: #{tpu_custom_call.1} parent=1 // loop_exit
      _
    %1026 = vsyncpa [#allocation5], 1
    %s1027 = scalar_lea.sflag [#allocation5], 1
    %1028 = vsyncpa %s1027, 1
    %1029 = vsyncpa [#allocation6], 1
    %s1030 = scalar_lea.sflag [#allocation6], 1
    %1031 = vsyncpa %s1030, 1

</llo_original>
